<compile_context>
chip_gen: v5e
topology: v5e:2x2
jax: 0.10.0
libtpu: 0.0.40
codegen_flags: <defaults>
</compile_context>

<pallas_src>
import jax
import jax.numpy as jnp
from jax.experimental import pallas as pl
from jax.experimental.pallas import tpu as pltpu

ROWS, COLS = 6, 7
IN_DIM = ROWS * COLS          # 42
H1, H2, H3 = 50, 100, 50
OUT_DIM = COLS                # 7
OUT_PAD = 8                   # narrow output width (7 useful lanes + 1 pad)
LANE = 128                    # lane-dense padded feature width for matmuls

_NEG_BIG = -1e30              # Python float -> inlined literal, NOT a captured array


def _fc_kernel(x_ref,
               w1_ref, b1_ref,
               w2_ref, b2_ref,
               w3_ref, b3_ref,
               w4_ref, b4_ref,
               out_ref):
    # In-kernel bf16 cast: input travels as f32 from HBM, cast is hidden under DMA.
    x = x_ref[...].astype(jnp.bfloat16)                        # (TM, 42)

    # Layer 1: Linear(42 -> 50, padded to 128) + ReLU
    h = jnp.dot(x, w1_ref[...], preferred_element_type=jnp.float32) + b1_ref[...]
    h = jnp.maximum(h, 0.0).astype(jnp.bfloat16)

    # Layer 2: Linear(50 -> 100, padded 128 -> 128) + ReLU
    h = jnp.dot(h, w2_ref[...], preferred_element_type=jnp.float32) + b2_ref[...]
    h = jnp.maximum(h, 0.0).astype(jnp.bfloat16)

    # Layer 3: Linear(100 -> 50, padded 128 -> 128) + ReLU
    h = jnp.dot(h, w3_ref[...], preferred_element_type=jnp.float32) + b3_ref[...]
    h = jnp.maximum(h, 0.0).astype(jnp.bfloat16)

    # Layer 4: Linear(50 -> 7, padded 128 -> 128)
    z = jnp.dot(h, w4_ref[...], preferred_element_type=jnp.float32) + b4_ref[...]

    # Fused final ReLU + padded-lane mask (lanes >= OUT_DIM would otherwise
    # contribute exp(0)=1 to the softmax denominator).
    lane = jax.lax.broadcasted_iota(jnp.int32, z.shape, 1)
    logits = jnp.where(lane < OUT_DIM, jnp.maximum(z, 0.0), _NEG_BIG)

    # Numerically stable softmax over the lane dim (exact divide).
    m = jnp.max(logits, axis=-1, keepdims=True)
    e = jnp.exp(logits - m)
    denom = jnp.sum(e, axis=-1, keepdims=True)
    probs = e / denom

    # Narrow store: only the first OUT_PAD lanes go back to HBM.
    out_ref[...] = probs[:, :OUT_PAD].astype(out_ref.dtype)


def _round_up(x, m):
    return (x + m - 1) // m * m


def _choose_tiling(b, tm_max):
    """Adaptive batch tile: amortize per-step overhead, avoid pathological
    padding, and keep >= 2 grid steps for large batches (both v7x TCs)."""
    b8 = _round_up(max(b, 1), 8)
    n_tiles = pl.cdiv(b8, tm_max)
    if n_tiles == 1 and b8 >= 256:
        n_tiles = 2
    tm = _round_up(pl.cdiv(b8, n_tiles), 8)
    return tm, tm * n_tiles, n_tiles


def prepare_params(params):
    """One-time prep: transpose to (in, out), zero-pad feature dims to 128,
    cast weights to bf16 (f32 accumulation in-kernel); biases stay f32 so the
    epilogue math is portable across v5e/v6e/v7x."""
    (w1, b1), (w2, b2), (w3, b3), (w4, b4) = params

    def pad_w(w_t, rows, cols):
        out = jnp.zeros((rows, cols), jnp.bfloat16)
        return out.at[:w_t.shape[0], :w_t.shape[1]].set(w_t.astype(jnp.bfloat16))

    def pad_b(bias):
        out = jnp.zeros((1, LANE), jnp.float32)
        return out.at[0, :bias.shape[0]].set(bias.astype(jnp.float32))

    return (
        pad_w(w1.T, IN_DIM, LANE), pad_b(b1),
        pad_w(w2.T, LANE, LANE), pad_b(b2),
        pad_w(w3.T, LANE, LANE), pad_b(b3),
        pad_w(w4.T, LANE, LANE), pad_b(b4),
    )


def fully_connected_forward(state, prepped_params, *, tm_max=4096):
    """state: (B, rows, columns) float32 -> (B, columns) softmax probabilities."""
    b = state.shape[0]
    x = state.reshape(b, -1).astype(jnp.float32)               # (B, 42), stays f32

    tm, b_pad, n_tiles = _choose_tiling(b, tm_max)
    if b_pad != b:
        x = jnp.pad(x, ((0, b_pad - b), (0, 0)))

    w1, b1, w2, b2, w3, b3, w4, b4 = prepped_params

    in_specs = [
        pl.BlockSpec((tm, IN_DIM), lambda i: (i, 0)),          # x: tiled over batch
        pl.BlockSpec((IN_DIM, LANE), lambda i: (0, 0)),        # w1: VMEM-resident
        pl.BlockSpec((1, LANE), lambda i: (0, 0)),             # b1
        pl.BlockSpec((LANE, LANE), lambda i: (0, 0)),          # w2
        pl.BlockSpec((1, LANE), lambda i: (0, 0)),             # b2
        pl.BlockSpec((LANE, LANE), lambda i: (0, 0)),          # w3
        pl.BlockSpec((1, LANE), lambda i: (0, 0)),             # b3
        pl.BlockSpec((LANE, LANE), lambda i: (0, 0)),          # w4
        pl.BlockSpec((1, LANE), lambda i: (0, 0)),             # b4
    ]

    out = pl.pallas_call(
        _fc_kernel,
        out_shape=jax.ShapeDtypeStruct((b_pad, OUT_PAD), jnp.float32),
        grid=(n_tiles,),
        in_specs=in_specs,
        out_specs=pl.BlockSpec((tm, OUT_PAD), lambda i: (i, 0)),
        compiler_params=pltpu.CompilerParams(
            dimension_semantics=("parallel",),
            vmem_limit_bytes=32 * 1024 * 1024),   # fits easily even on v7x (64 MiB phys)
    )(x, w1, b1, w2, b2, w3, b3, w4, b4)

    return out[:b, :OUT_DIM]


def init_params(key):
    """Deterministic PyTorch-style (out_features, in_features) weights."""
    dims = [(H1, IN_DIM), (H2, H1), (H3, H2), (OUT_DIM, H3)]
    params = []
    for fan_out, fan_in in dims:
        kw, kb, key = jax.random.split(key, 3)
        bound = 1.0 / jnp.sqrt(fan_in)
        w = jax.random.uniform(kw, (fan_out, fan_in), jnp.float32, -bound, bound)
        bias = jax.random.uniform(kb, (fan_out,), jnp.float32, -bound, bound)
        params.append((w, bias))
    return params


def reference_forward(state, params):
    """Pure-JAX f32 reference, faithful to the PyTorch module."""
    x = state.reshape(state.shape[0], -1)
    for w, bias in params:
        x = jnp.maximum(x @ w.T + bias, 0.0)
    return jax.nn.softmax(x, axis=-1)


if __name__ == "__main__":
    key = jax.random.PRNGKey(0)
    k_params, k_state = jax.random.split(key)

    params = init_params(k_params)
    prepped = prepare_params(params)

    # Small batch of board states: (B=2, rows=6, columns=7)
    state = jax.random.normal(k_state, (2, ROWS, COLS), dtype=jnp.float32)

    probs = fully_connected_forward(state, prepped)
    probs = jax.block_until_ready(probs)

    assert probs.shape == (2, COLS)
    # Softmax rows sum to ~1 (exact divide -> tight tolerance).
    assert jnp.allclose(jnp.sum(probs, axis=-1), 1.0, atol=1e-3)
    # Matches the f32 reference within bf16-matmul tolerance.
    ref = reference_forward(state, params)
    assert jnp.allclose(probs, ref, atol=5e-2)

    print("KERNEL_OK")
</pallas_src>

<mosaic_0001>
module attributes {stable_mosaic.version = 11 : i64} {
  func.func @_fc_kernel(%arg0: i32, %arg1: memref<8x42xf32, #tpu.memory_space<vmem>>, %arg2: memref<42x128xbf16, #tpu.memory_space<vmem>>, %arg3: memref<1x128xf32, #tpu.memory_space<vmem>>, %arg4: memref<128x128xbf16, #tpu.memory_space<vmem>>, %arg5: memref<1x128xf32, #tpu.memory_space<vmem>>, %arg6: memref<128x128xbf16, #tpu.memory_space<vmem>>, %arg7: memref<1x128xf32, #tpu.memory_space<vmem>>, %arg8: memref<128x128xbf16, #tpu.memory_space<vmem>>, %arg9: memref<1x128xf32, #tpu.memory_space<vmem>>, %arg10: memref<8x8xf32, #tpu.memory_space<vmem>>) attributes {dimension_semantics = [#tpu.dimension_semantics<parallel>], iteration_bounds = array<i64: 1>, scalar_prefetch = 0 : i64, scratch_operands = 0 : i64, tpu.core_type = #tpu.core_type<tc>, window_params = [{transform_indices = @transform_0, window_bounds = array<i64: 8, 42>}, {pipeline_mode = #tpu.pipeline_mode<synchronous>, transform_indices = @transform_1, window_bounds = array<i64: 42, 128>}, {pipeline_mode = #tpu.pipeline_mode<synchronous>, transform_indices = @transform_2, window_bounds = array<i64: 1, 128>}, {pipeline_mode = #tpu.pipeline_mode<synchronous>, transform_indices = @transform_3, window_bounds = array<i64: 128, 128>}, {pipeline_mode = #tpu.pipeline_mode<synchronous>, transform_indices = @transform_4, window_bounds = array<i64: 1, 128>}, {pipeline_mode = #tpu.pipeline_mode<synchronous>, transform_indices = @transform_5, window_bounds = array<i64: 128, 128>}, {pipeline_mode = #tpu.pipeline_mode<synchronous>, transform_indices = @transform_6, window_bounds = array<i64: 1, 128>}, {pipeline_mode = #tpu.pipeline_mode<synchronous>, transform_indices = @transform_7, window_bounds = array<i64: 128, 128>}, {pipeline_mode = #tpu.pipeline_mode<synchronous>, transform_indices = @transform_8, window_bounds = array<i64: 1, 128>}, {transform_indices = @transform_9, window_bounds = array<i64: 8, 8>}]} {
    %c0 = arith.constant 0 : index
    %c0_0 = arith.constant 0 : index
    %0 = vector.load %arg1[%c0, %c0_0] : memref<8x42xf32, #tpu.memory_space<vmem>>, vector<8x42xf32>
    %1 = arith.truncf %0 : vector<8x42xf32> to vector<8x42xbf16>
    %c0_1 = arith.constant 0 : index
    %c0_2 = arith.constant 0 : index
    %2 = vector.load %arg2[%c0_1, %c0_2] : memref<42x128xbf16, #tpu.memory_space<vmem>>, vector<42x128xbf16>
    %cst = arith.constant dense<0.000000e+00> : vector<8x128xf32>
    %3 = tpu.matmul %1, %2, %cst {dimension_numbers = #tpu.dot_dimension_numbers<[1], [0], [0], [1], [0, 0, 1, 1], [], []>} : vector<8x42xbf16>, vector<42x128xbf16>, vector<8x128xf32> -> vector<8x128xf32>
    %c0_3 = arith.constant 0 : index
    %c0_4 = arith.constant 0 : index
    %4 = vector.load %arg3[%c0_3, %c0_4] : memref<1x128xf32, #tpu.memory_space<vmem>>, vector<1x128xf32>
    %5 = vector.broadcast %4 : vector<1x128xf32> to vector<8x128xf32>
    %6 = arith.addf %3, %5 : vector<8x128xf32>
    %cst_5 = arith.constant 0.000000e+00 : f32
    %7 = vector.broadcast %cst_5 : f32 to vector<8x128xf32>
    %8 = arith.maximumf %6, %7 : vector<8x128xf32>
    %9 = arith.truncf %8 : vector<8x128xf32> to vector<8x128xbf16>
    %c0_6 = arith.constant 0 : index
    %c0_7 = arith.constant 0 : index
    %10 = vector.load %arg4[%c0_6, %c0_7] : memref<128x128xbf16, #tpu.memory_space<vmem>>, vector<128x128xbf16>
    %cst_8 = arith.constant dense<0.000000e+00> : vector<8x128xf32>
    %11 = tpu.matmul %9, %10, %cst_8 {dimension_numbers = #tpu.dot_dimension_numbers<[1], [0], [0], [1], [0, 0, 1, 1], [], []>} : vector<8x128xbf16>, vector<128x128xbf16>, vector<8x128xf32> -> vector<8x128xf32>
    %c0_9 = arith.constant 0 : index
    %c0_10 = arith.constant 0 : index
    %12 = vector.load %arg5[%c0_9, %c0_10] : memref<1x128xf32, #tpu.memory_space<vmem>>, vector<1x128xf32>
    %13 = vector.broadcast %12 : vector<1x128xf32> to vector<8x128xf32>
    %14 = arith.addf %11, %13 : vector<8x128xf32>
    %cst_11 = arith.constant 0.000000e+00 : f32
    %15 = vector.broadcast %cst_11 : f32 to vector<8x128xf32>
    %16 = arith.maximumf %14, %15 : vector<8x128xf32>
    %17 = arith.truncf %16 : vector<8x128xf32> to vector<8x128xbf16>
    %c0_12 = arith.constant 0 : index
    %c0_13 = arith.constant 0 : index
    %18 = vector.load %arg6[%c0_12, %c0_13] : memref<128x128xbf16, #tpu.memory_space<vmem>>, vector<128x128xbf16>
    %cst_14 = arith.constant dense<0.000000e+00> : vector<8x128xf32>
    %19 = tpu.matmul %17, %18, %cst_14 {dimension_numbers = #tpu.dot_dimension_numbers<[1], [0], [0], [1], [0, 0, 1, 1], [], []>} : vector<8x128xbf16>, vector<128x128xbf16>, vector<8x128xf32> -> vector<8x128xf32>
    %c0_15 = arith.constant 0 : index
    %c0_16 = arith.constant 0 : index
    %20 = vector.load %arg7[%c0_15, %c0_16] : memref<1x128xf32, #tpu.memory_space<vmem>>, vector<1x128xf32>
    %21 = vector.broadcast %20 : vector<1x128xf32> to vector<8x128xf32>
    %22 = arith.addf %19, %21 : vector<8x128xf32>
    %cst_17 = arith.constant 0.000000e+00 : f32
    %23 = vector.broadcast %cst_17 : f32 to vector<8x128xf32>
    %24 = arith.maximumf %22, %23 : vector<8x128xf32>
    %25 = arith.truncf %24 : vector<8x128xf32> to vector<8x128xbf16>
    %c0_18 = arith.constant 0 : index
    %c0_19 = arith.constant 0 : index
    %26 = vector.load %arg8[%c0_18, %c0_19] : memref<128x128xbf16, #tpu.memory_space<vmem>>, vector<128x128xbf16>
    %cst_20 = arith.constant dense<0.000000e+00> : vector<8x128xf32>
    %27 = tpu.matmul %25, %26, %cst_20 {dimension_numbers = #tpu.dot_dimension_numbers<[1], [0], [0], [1], [0, 0, 1, 1], [], []>} : vector<8x128xbf16>, vector<128x128xbf16>, vector<8x128xf32> -> vector<8x128xf32>
    %c0_21 = arith.constant 0 : index
    %c0_22 = arith.constant 0 : index
    %28 = vector.load %arg9[%c0_21, %c0_22] : memref<1x128xf32, #tpu.memory_space<vmem>>, vector<1x128xf32>
    %29 = vector.broadcast %28 : vector<1x128xf32> to vector<8x128xf32>
    %30 = arith.addf %27, %29 : vector<8x128xf32>
    %31 = tpu.iota {dimensions = array<i32: 1>} : vector<8x128xi32>
    %c7_i32 = arith.constant 7 : i32
    %32 = vector.broadcast %c7_i32 : i32 to vector<8x128xi32>
    %33 = arith.cmpi slt, %31, %32 : vector<8x128xi32>
    %cst_23 = arith.constant 0.000000e+00 : f32
    %34 = vector.broadcast %cst_23 : f32 to vector<8x128xf32>
    %35 = arith.maximumf %30, %34 : vector<8x128xf32>
    %cst_24 = arith.constant -1.000000e+30 : f32
    %36 = vector.broadcast %cst_24 : f32 to vector<8x128xf32>
    %37 = arith.select %33, %35, %36 : vector<8x128xi1>, vector<8x128xf32>
    %cst_25 = arith.constant dense<0xFF800000> : vector<8xf32>
    %38 = vector.multi_reduction <maximumf>, %37, %cst_25 [1] : vector<8x128xf32> to vector<8xf32>
    %39 = vector.shape_cast %38 : vector<8xf32> to vector<8x1xf32>
    %40 = vector.broadcast %39 : vector<8x1xf32> to vector<8x128xf32>
    %41 = arith.subf %37, %40 : vector<8x128xf32>
    %42 = math.exp %41 : vector<8x128xf32>
    %cst_26 = arith.constant dense<0.000000e+00> : vector<8xf32>
    %43 = vector.multi_reduction <add>, %42, %cst_26 [1] : vector<8x128xf32> to vector<8xf32>
    %44 = vector.shape_cast %43 : vector<8xf32> to vector<8x1xf32>
    %45 = vector.broadcast %44 : vector<8x1xf32> to vector<8x128xf32>
    %46 = arith.divf %42, %45 : vector<8x128xf32>
    %47 = vector.extract_strided_slice %46 {offsets = [0, 0], sizes = [8, 8], strides = [1, 1]} : vector<8x128xf32> to vector<8x8xf32>
    %c0_27 = arith.constant 0 : index
    %c0_28 = arith.constant 0 : index
    %48 = vector.load %arg10[%c0_27, %c0_28] : memref<8x8xf32, #tpu.memory_space<vmem>>, vector<8x8xf32>
    tpu.vector_store %arg10[%c0_27, %c0_28], %47 {strides = array<i32>} : memref<8x8xf32, #tpu.memory_space<vmem>>, vector<8x8xf32>,
    return
  }
  func.func @transform_0(%arg0: i32) -> (i32, i32) {
    %c0_i32 = arith.constant 0 : i32
    %c0_i32_0 = arith.constant 0 : i32
    return %arg0, %c0_i32 : i32, i32
  }
  func.func @transform_1(%arg0: i32) -> (i32, i32) {
    %c0_i32 = arith.constant 0 : i32
    %c0_i32_0 = arith.constant 0 : i32
    %c0_i32_1 = arith.constant 0 : i32
    return %c0_i32, %c0_i32_0 : i32, i32
  }
  func.func @transform_2(%arg0: i32) -> (i32, i32) {
    %c0_i32 = arith.constant 0 : i32
    %c0_i32_0 = arith.constant 0 : i32
    %c0_i32_1 = arith.constant 0 : i32
    return %c0_i32, %c0_i32_0 : i32, i32
  }
  func.func @transform_3(%arg0: i32) -> (i32, i32) {
    %c0_i32 = arith.constant 0 : i32
    %c0_i32_0 = arith.constant 0 : i32
    %c0_i32_1 = arith.constant 0 : i32
    return %c0_i32, %c0_i32_0 : i32, i32
  }
  func.func @transform_4(%arg0: i32) -> (i32, i32) {
    %c0_i32 = arith.constant 0 : i32
    %c0_i32_0 = arith.constant 0 : i32
    %c0_i32_1 = arith.constant 0 : i32
    return %c0_i32, %c0_i32_0 : i32, i32
  }
  func.func @transform_5(%arg0: i32) -> (i32, i32) {
    %c0_i32 = arith.constant 0 : i32
    %c0_i32_0 = arith.constant 0 : i32
    %c0_i32_1 = arith.constant 0 : i32
    return %c0_i32, %c0_i32_0 : i32, i32
  }
  func.func @transform_6(%arg0: i32) -> (i32, i32) {
    %c0_i32 = arith.constant 0 : i32
    %c0_i32_0 = arith.constant 0 : i32
    %c0_i32_1 = arith.constant 0 : i32
    return %c0_i32, %c0_i32_0 : i32, i32
  }
  func.func @transform_7(%arg0: i32) -> (i32, i32) {
    %c0_i32 = arith.constant 0 : i32
    %c0_i32_0 = arith.constant 0 : i32
    %c0_i32_1 = arith.constant 0 : i32
    return %c0_i32, %c0_i32_0 : i32, i32
  }
  func.func @transform_8(%arg0: i32) -> (i32, i32) {
    %c0_i32 = arith.constant 0 : i32
    %c0_i32_0 = arith.constant 0 : i32
    %c0_i32_1 = arith.constant 0 : i32
    return %c0_i32, %c0_i32_0 : i32, i32
  }
  func.func @transform_9(%arg0: i32) -> (i32, i32) {
    %c0_i32 = arith.constant 0 : i32
    %c0_i32_0 = arith.constant 0 : i32
    return %arg0, %c0_i32 : i32, i32
  }
}

</mosaic_0001>

<llo_original>
// kernel: tpu_custom_call.1
$region0: #{tpu_custom_call.1}
  #allocation0 [shape = 'u32[]', space=smem, size = 0x4, offset = 0x4, fixed_abs, tag = 'smem constant byte address 0x4 - core index']
  #allocation1 [shape = 'u32[72,128]{1,0:T(1,128)}', space=vmem, size = 0x9000, scoped, tag = 'internal scratch']
  %s0 = inlined_call_operand.hbm [shape: f32[8,42], index: 0, kind: input, shape index: {}]
  %s1 = inlined_call_operand.hbm [shape: bf16[42,128], index: 1, kind: input, shape index: {}]
  %s2 = inlined_call_operand.vmem [shape: f32[1,128], index: 2, kind: input, shape index: {}]
  %s3 = inlined_call_operand.hbm [shape: bf16[128,128], index: 3, kind: input, shape index: {}]
  %s4 = inlined_call_operand.vmem [shape: f32[1,128], index: 4, kind: input, shape index: {}]
  %s5 = inlined_call_operand.hbm [shape: bf16[128,128], index: 5, kind: input, shape index: {}]
  %s6 = inlined_call_operand.vmem [shape: f32[1,128], index: 6, kind: input, shape index: {}]
  %s7 = inlined_call_operand.hbm [shape: bf16[128,128], index: 7, kind: input, shape index: {}]
  %s8 = inlined_call_operand.vmem [shape: f32[1,128], index: 8, kind: input, shape index: {}]
  %s9 = inlined_call_operand.hbm [shape: f32[8,8], index: 9, kind: output, shape index: {}]
  %s10 = sld [smem:[#allocation0]]
  $region66: #{tpu_custom_call.1} parent=0
    _
  %s12 = ssub.s32 1, %s10
  %s13 = scalar_select 0, %s12, %s10
  $region1: #{tpu_custom_call.1} parent=0
    #allocation2 [shape = 'u8[4096]{0}', space=vmem, size = 0x1000, scoped, tag = 'input window, operand 0, single buffered']
    #allocation3 [shape = 's32[1]{0}', space=sflag, size = 0x4, scoped, tag = 'scoped memory for tpu_custom_call.1']
    #allocation4 [shape = 's32[1]{0}', space=sflag, size = 0x4, scoped, tag = 'scoped memory for tpu_custom_call.1']
    #allocation5 [shape = 'u8[12288]{0}', space=vmem, size = 0x3000, scoped, tag = 'input window, operand 1, single buffered']
    #allocation6 [shape = 's32[1]{0}', space=sflag, size = 0x4, scoped, tag = 'scoped memory for tpu_custom_call.1']
    #allocation7 [shape = 'u8[32768]{0}', space=vmem, size = 0x8000, scoped, tag = 'input window, operand 3, single buffered']
    #allocation8 [shape = 'u8[32768]{0}', space=vmem, size = 0x8000, scoped, tag = 'input window, operand 5, single buffered']
    #allocation9 [shape = 's32[1]{0}', space=sflag, size = 0x4, scoped, tag = 'scoped memory for tpu_custom_call.1']
    #allocation10 [shape = 'u8[32768]{0}', space=vmem, size = 0x8000, scoped, tag = 'input window, operand 7, single buffered']
    #allocation11 [shape = 'u8[4096]{0}', space=vmem, size = 0x1000, scoped, tag = 'output window, operand 0, single buffered']
    %14 = vsyncpa [#allocation3], 0
    %15 = vsyncpa [#allocation6], 0
    %16 = vsyncpa [#allocation9], 0
    %17 = vsyncpa [#allocation4], 0
    // Predicated region
    $region2: #{tpu_custom_call.1} parent=1 // pred_check
      _
    $region3: #{tpu_custom_call.1} parent=1 // pred_check_branch
      %19 = sbr.rel (0) target = $region5
    $region4: #{tpu_custom_call.1} parent=1 // pred_region
      %21 = vsyncadd [#allocation3], 0
      %s23 = sshll.u32 %s0, 4
      %s24 = int_to_ptr.hbm [resolvable:$true] %s23
      %s25 = sshll.u32 [#allocation2], 4
      %s26 = int_to_ptr.vmem [resolvable:$true] %s25
      %28 = dma.hbm_to_vmem [thread:$0]  %s24, 128, %s26, [#allocation3]
    $region5: #{tpu_custom_call.1} parent=1 // pred_fallthru
      _
    // Predicated region
    $region6: #{tpu_custom_call.1} parent=1 // pred_check
      _
    $region7: #{tpu_custom_call.1} parent=1 // pred_check_branch
      %30 = sbr.rel (0) target = $region9
    $region8: #{tpu_custom_call.1} parent=1 // pred_region
      %32 = vsyncadd [#allocation6], 0
      %s33 = sshll.u32 %s1, 4
      %s34 = int_to_ptr.hbm [resolvable:$true] %s33
      %s35 = sshll.u32 [#allocation5], 4
      %s36 = int_to_ptr.vmem [resolvable:$true] %s35
      %41 = dma.hbm_to_vmem [thread:$0]  %s34, 384, %s36, [#allocation6], 64, 64, 4
    $region9: #{tpu_custom_call.1} parent=1 // pred_fallthru
      _
    // Predicated region
    $region10: #{tpu_custom_call.1} parent=1 // pred_check
      _
    $region11: #{tpu_custom_call.1} parent=1 // pred_check_branch
      %43 = sbr.rel (0) target = $region13
    $region12: #{tpu_custom_call.1} parent=1 // pred_region
      _
    $region13: #{tpu_custom_call.1} parent=1 // pred_fallthru
      _
    // Predicated region
    $region14: #{tpu_custom_call.1} parent=1 // pred_check
      _
    $region15: #{tpu_custom_call.1} parent=1 // pred_check_branch
      %45 = sbr.rel (0) target = $region17
    $region16: #{tpu_custom_call.1} parent=1 // pred_region
      %47 = vsyncadd [#allocation6], 0
      %s48 = sshll.u32 %s3, 4
      %s49 = int_to_ptr.hbm [resolvable:$true] %s48
      %s50 = sshll.u32 [#allocation7], 4
      %s51 = int_to_ptr.vmem [resolvable:$true] %s50
      %56 = dma.hbm_to_vmem [thread:$0]  %s49, 1024, %s51, [#allocation6], 64, 64, 4
    $region17: #{tpu_custom_call.1} parent=1 // pred_fallthru
      _
    // Predicated region
    $region18: #{tpu_custom_call.1} parent=1 // pred_check
      _
    $region19: #{tpu_custom_call.1} parent=1 // pred_check_branch
      %58 = sbr.rel (0) target = $region21
    $region20: #{tpu_custom_call.1} parent=1 // pred_region
      _
    $region21: #{tpu_custom_call.1} parent=1 // pred_fallthru
      _
    // Predicated region
    $region22: #{tpu_custom_call.1} parent=1 // pred_check
      _
    $region23: #{tpu_custom_call.1} parent=1 // pred_check_branch
      %60 = sbr.rel (0) target = $region25
    $region24: #{tpu_custom_call.1} parent=1 // pred_region
      %62 = vsyncadd [#allocation9], 0
      %s63 = sshll.u32 %s5, 4
      %s64 = int_to_ptr.hbm [resolvable:$true] %s63
      %s65 = sshll.u32 [#allocation8], 4
      %s66 = int_to_ptr.vmem [resolvable:$true] %s65
      %71 = dma.hbm_to_vmem [thread:$0]  %s64, 1024, %s66, [#allocation9], 64, 64, 4
    $region25: #{tpu_custom_call.1} parent=1 // pred_fallthru
      _
    // Predicated region
    $region26: #{tpu_custom_call.1} parent=1 // pred_check
      _
    $region27: #{tpu_custom_call.1} parent=1 // pred_check_branch
      %73 = sbr.rel (0) target = $region29
    $region28: #{tpu_custom_call.1} parent=1 // pred_region
      _
    $region29: #{tpu_custom_call.1} parent=1 // pred_fallthru
      _
    // Predicated region
    $region30: #{tpu_custom_call.1} parent=1 // pred_check
      _
    $region31: #{tpu_custom_call.1} parent=1 // pred_check_branch
      %75 = sbr.rel (0) target = $region33
    $region32: #{tpu_custom_call.1} parent=1 // pred_region
      %77 = vsyncadd [#allocation9], 0
      %s78 = sshll.u32 %s7, 4
      %s79 = int_to_ptr.hbm [resolvable:$true] %s78
      %s80 = sshll.u32 [#allocation10], 4
      %s81 = int_to_ptr.vmem [resolvable:$true] %s80
      %86 = dma.hbm_to_vmem [thread:$0]  %s79, 1024, %s81, [#allocation9], 64, 64, 4
    $region33: #{tpu_custom_call.1} parent=1 // pred_fallthru
      _
    // Predicated region
    $region34: #{tpu_custom_call.1} parent=1 // pred_check
      _
    $region35: #{tpu_custom_call.1} parent=1 // pred_check_branch
      %88 = sbr.rel (0) target = $region37
    $region36: #{tpu_custom_call.1} parent=1 // pred_region
      _
    $region37: #{tpu_custom_call.1} parent=1 // pred_fallthru
      _
    // Predicated region
    $region38: #{tpu_custom_call.1} parent=1 // pred_check
      _
    $region39: #{tpu_custom_call.1} parent=1 // pred_check_branch
      %90 = sbr.rel (0) target = $region41
    $region40: #{tpu_custom_call.1} parent=1 // pred_region
      %92 = dma.done [#allocation3], 128
    $region41: #{tpu_custom_call.1} parent=1 // pred_fallthru
      _
    // Predicated region
    $region42: #{tpu_custom_call.1} parent=1 // pred_check
      _
    $region43: #{tpu_custom_call.1} parent=1 // pred_check_branch
      %94 = sbr.rel (0) target = $region45
    $region44: #{tpu_custom_call.1} parent=1 // pred_region
      %96 = dma.done [#allocation6], 384
    $region45: #{tpu_custom_call.1} parent=1 // pred_fallthru
      _
    // Predicated region
    $region46: #{tpu_custom_call.1} parent=1 // pred_check
      _
    $region47: #{tpu_custom_call.1} parent=1 // pred_check_branch
      %98 = sbr.rel (0) target = $region49
    $region48: #{tpu_custom_call.1} parent=1 // pred_region
      %100 = dma.done [#allocation6], 1024
    $region49: #{tpu_custom_call.1} parent=1 // pred_fallthru
      _
    // Predicated region
    $region50: #{tpu_custom_call.1} parent=1 // pred_check
      _
    $region51: #{tpu_custom_call.1} parent=1 // pred_check_branch
      %102 = sbr.rel (0) target = $region53
    $region52: #{tpu_custom_call.1} parent=1 // pred_region
      %104 = dma.done [#allocation9], 1024
    $region53: #{tpu_custom_call.1} parent=1 // pred_fallthru
      _
    // Predicated region
    $region54: #{tpu_custom_call.1} parent=1 // pred_check
      _
    $region55: #{tpu_custom_call.1} parent=1 // pred_check_branch
      %106 = sbr.rel (0) target = $region57
    $region56: #{tpu_custom_call.1} parent=1 // pred_region
      %108 = dma.done [#allocation9], 1024
    $region57: #{tpu_custom_call.1} parent=1 // pred_fallthru
      _
    %v110 = vld [vmem:[#allocation2] sm:$0xff]
    %v111 = vpack.c.bf16 %v110, %v110
    %v112 = vld [vmem:[#allocation5] sm:$0xf]
    %v113 = vld [vmem:[#allocation5 + $0x4] sm:$0xf]
    %v114 = vld [vmem:[#allocation5 + $0x8] sm:$0xf]
    %v115 = vld [vmem:[#allocation5 + $0xc] sm:$0xf]
    %v116 = vld [vmem:[#allocation5 + $0x10] sm:$0xf]
    %v117 = vld [vmem:[#allocation5 + $0x14] sm:$0x1]
    %v118 = vld [vmem:[%s2] sm:$0x1]
    %v120 = vperm.slane %v118, 0
    %v128 = vunpack.c.l.b16 %v112
    %v129 = vunpack.c.l.b16 %v113
    %v130 = vunpack.c.l.b16 %v114
    %v131 = vunpack.c.l.b16 %v115
    %v132 = vunpack.c.l.b16 %v116
    %v133 = vunpack.c.l.b16 %v117
    %v134 = vpack.c.b16 %v129, %v128
    %v135 = vpack.c.b16 %v131, %v130
    %v136 = vpack.c.b16 %v133, %v132
    %vm139 = vcmask 343040
    %v141 = vsel %vm139, %v111, 0
    %vm143 = vcmask 1044480
    %v145 = vsel %vm143, %v136, 0
    %147 = vmatpush.bf16.msra.mxu0 0
    %148 = vmatpush.bf16.msra.mxu0 0
    %149 = vmatpush.bf16.msra.mxu0 0
    %150 = vmatpush.bf16.msra.mxu0 0
    %151 = vmatpush.bf16.msra.mxu0 0
    %152 = vmatpush.bf16.msra.mxu0 %v145
    %153 = vmatpush.bf16.msra.mxu0 %v135
    %154 = vmatpush.bf16.msra.mxu0 %v134
    %155 = vmatmul.bf16.gmra.mxu0 %v141
    %v156 = vpop.f32.mrf.mxu0
    %v157 = vadd.f32 %v120, %v156
    %v158 = vpop.f32.mrf.mxu0
    %159 = vdwg.mxu0
    %v160 = vmax.f32 %v157, 0.0
    %v161 = vpack.c.bf16 %v160, %v160
    %v162 = vld [vmem:[#allocation7] sm:$0xf]
    %v163 = vld [vmem:[#allocation7 + $0x4] sm:$0xf]
    %v164 = vld [vmem:[#allocation7 + $0x8] sm:$0xf]
    %v165 = vld [vmem:[#allocation7 + $0xc] sm:$0xf]
    %v166 = vld [vmem:[#allocation7 + $0x10] sm:$0xf]
    %v167 = vld [vmem:[#allocation7 + $0x14] sm:$0xf]
    %v168 = vld [vmem:[#allocation7 + $0x18] sm:$0xf]
    %v169 = vld [vmem:[#allocation7 + $0x1c] sm:$0xf]
    %v170 = vld [vmem:[#allocation7 + $0x20] sm:$0xf]
    %v171 = vld [vmem:[#allocation7 + $0x24] sm:$0xf]
    %v172 = vld [vmem:[#allocation7 + $0x28] sm:$0xf]
    %v173 = vld [vmem:[#allocation7 + $0x2c] sm:$0xf]
    %v174 = vld [vmem:[#allocation7 + $0x30] sm:$0xf]
    %v175 = vld [vmem:[#allocation7 + $0x34] sm:$0xf]
    %v176 = vld [vmem:[#allocation7 + $0x38] sm:$0xf]
    %v177 = vld [vmem:[#allocation7 + $0x3c] sm:$0xf]
    %v178 = vld [vmem:[%s4] sm:$0x1]
    %v180 = vperm.slane %v178, 0
    %v198 = vunpack.c.l.b16 %v162
    %v199 = vunpack.c.l.b16 %v163
    %v200 = vunpack.c.l.b16 %v164
    %v201 = vunpack.c.l.b16 %v165
    %v202 = vunpack.c.l.b16 %v166
    %v203 = vunpack.c.l.b16 %v167
    %v204 = vunpack.c.l.b16 %v168
    %v205 = vunpack.c.l.b16 %v169
    %v206 = vunpack.c.l.b16 %v170
    %v207 = vunpack.c.l.b16 %v171
    %v208 = vunpack.c.l.b16 %v172
    %v209 = vunpack.c.l.b16 %v173
    %v210 = vunpack.c.l.b16 %v174
    %v211 = vunpack.c.l.b16 %v175
    %v212 = vunpack.c.l.b16 %v176
    %v213 = vunpack.c.l.b16 %v177
    %v214 = vpack.c.b16 %v199, %v198
    %v215 = vpack.c.b16 %v201, %v200
    %v216 = vpack.c.b16 %v203, %v202
    %v217 = vpack.c.b16 %v205, %v204
    %v218 = vpack.c.b16 %v207, %v206
    %v219 = vpack.c.b16 %v209, %v208
    %v220 = vpack.c.b16 %v211, %v210
    %v221 = vpack.c.b16 %v213, %v212
    %230 = vmatpush.bf16.msra.mxu0 %v221
    %231 = vmatpush.bf16.msra.mxu0 %v220
    %232 = vmatpush.bf16.msra.mxu0 %v219
    %233 = vmatpush.bf16.msra.mxu0 %v218
    %234 = vmatpush.bf16.msra.mxu0 %v217
    %235 = vmatpush.bf16.msra.mxu0 %v216
    %236 = vmatpush.bf16.msra.mxu0 %v215
    %237 = vmatpush.bf16.msra.mxu0 %v214
    %238 = vmatmul.bf16.gmra.mxu0 %v161
    %v239 = vpop.f32.mrf.mxu0
    %v240 = vadd.f32 %v180, %v239
    %v241 = vpop.f32.mrf.mxu0
    %242 = vdwg.mxu0
    %v243 = vmax.f32 %v240, 0.0
    %v244 = vpack.c.bf16 %v243, %v243
    %v245 = vld [vmem:[#allocation8] sm:$0xf]
    %v246 = vld [vmem:[#allocation8 + $0x4] sm:$0xf]
    %v247 = vld [vmem:[#allocation8 + $0x8] sm:$0xf]
    %v248 = vld [vmem:[#allocation8 + $0xc] sm:$0xf]
    %v249 = vld [vmem:[#allocation8 + $0x10] sm:$0xf]
    %v250 = vld [vmem:[#allocation8 + $0x14] sm:$0xf]
    %v251 = vld [vmem:[#allocation8 + $0x18] sm:$0xf]
    %v252 = vld [vmem:[#allocation8 + $0x1c] sm:$0xf]
    %v253 = vld [vmem:[#allocation8 + $0x20] sm:$0xf]
    %v254 = vld [vmem:[#allocation8 + $0x24] sm:$0xf]
    %v255 = vld [vmem:[#allocation8 + $0x28] sm:$0xf]
    %v256 = vld [vmem:[#allocation8 + $0x2c] sm:$0xf]
    %v257 = vld [vmem:[#allocation8 + $0x30] sm:$0xf]
    %v258 = vld [vmem:[#allocation8 + $0x34] sm:$0xf]
    %v259 = vld [vmem:[#allocation8 + $0x38] sm:$0xf]
    %v260 = vld [vmem:[#allocation8 + $0x3c] sm:$0xf]
    %v261 = vld [vmem:[%s6] sm:$0x1]
    %v263 = vperm.slane %v261, 0
    %v281 = vunpack.c.l.b16 %v245
    %v282 = vunpack.c.l.b16 %v246
    %v283 = vunpack.c.l.b16 %v247
    %v284 = vunpack.c.l.b16 %v248
    %v285 = vunpack.c.l.b16 %v249
    %v286 = vunpack.c.l.b16 %v250
    %v287 = vunpack.c.l.b16 %v251
    %v288 = vunpack.c.l.b16 %v252
    %v289 = vunpack.c.l.b16 %v253
    %v290 = vunpack.c.l.b16 %v254
    %v291 = vunpack.c.l.b16 %v255
    %v292 = vunpack.c.l.b16 %v256
    %v293 = vunpack.c.l.b16 %v257
    %v294 = vunpack.c.l.b16 %v258
    %v295 = vunpack.c.l.b16 %v259
    %v296 = vunpack.c.l.b16 %v260
    %v297 = vpack.c.b16 %v282, %v281
    %v298 = vpack.c.b16 %v284, %v283
    %v299 = vpack.c.b16 %v286, %v285
    %v300 = vpack.c.b16 %v288, %v287
    %v301 = vpack.c.b16 %v290, %v289
    %v302 = vpack.c.b16 %v292, %v291
    %v303 = vpack.c.b16 %v294, %v293
    %v304 = vpack.c.b16 %v296, %v295
    %313 = vmatpush.bf16.msra.mxu0 %v304
    %314 = vmatpush.bf16.msra.mxu0 %v303
    %315 = vmatpush.bf16.msra.mxu0 %v302
    %316 = vmatpush.bf16.msra.mxu0 %v301
    %317 = vmatpush.bf16.msra.mxu0 %v300
    %318 = vmatpush.bf16.msra.mxu0 %v299
    %319 = vmatpush.bf16.msra.mxu0 %v298
    %320 = vmatpush.bf16.msra.mxu0 %v297
    %321 = vmatmul.bf16.gmra.mxu0 %v244
    %v322 = vpop.f32.mrf.mxu0
    %v323 = vadd.f32 %v263, %v322
    %v324 = vpop.f32.mrf.mxu0
    %325 = vdwg.mxu0
    %v326 = vmax.f32 %v323, 0.0
    %v327 = vpack.c.bf16 %v326, %v326
    %v328 = vld [vmem:[#allocation10] sm:$0xf]
    %v329 = vld [vmem:[#allocation10 + $0x4] sm:$0xf]
    %v330 = vld [vmem:[#allocation10 + $0x8] sm:$0xf]
    %v331 = vld [vmem:[#allocation10 + $0xc] sm:$0xf]
    %v332 = vld [vmem:[#allocation10 + $0x10] sm:$0xf]
    %v333 = vld [vmem:[#allocation10 + $0x14] sm:$0xf]
    %v334 = vld [vmem:[#allocation10 + $0x18] sm:$0xf]
    %v335 = vld [vmem:[#allocation10 + $0x1c] sm:$0xf]
    %v336 = vld [vmem:[#allocation10 + $0x20] sm:$0xf]
    %v337 = vld [vmem:[#allocation10 + $0x24] sm:$0xf]
    %v338 = vld [vmem:[#allocation10 + $0x28] sm:$0xf]
    %v339 = vld [vmem:[#allocation10 + $0x2c] sm:$0xf]
    %v340 = vld [vmem:[#allocation10 + $0x30] sm:$0xf]
    %v341 = vld [vmem:[#allocation10 + $0x34] sm:$0xf]
    %v342 = vld [vmem:[#allocation10 + $0x38] sm:$0xf]
    %v343 = vld [vmem:[#allocation10 + $0x3c] sm:$0xf]
    %v344 = vld [vmem:[%s8] sm:$0x1]
    %v346 = vperm.slane %v344, 0
    %v364 = vunpack.c.l.b16 %v328
    %v365 = vunpack.c.l.b16 %v329
    %v366 = vunpack.c.l.b16 %v330
    %v367 = vunpack.c.l.b16 %v331
    %v368 = vunpack.c.l.b16 %v332
    %v369 = vunpack.c.l.b16 %v333
    %v370 = vunpack.c.l.b16 %v334
    %v371 = vunpack.c.l.b16 %v335
    %v372 = vunpack.c.l.b16 %v336
    %v373 = vunpack.c.l.b16 %v337
    %v374 = vunpack.c.l.b16 %v338
    %v375 = vunpack.c.l.b16 %v339
    %v376 = vunpack.c.l.b16 %v340
    %v377 = vunpack.c.l.b16 %v341
    %v378 = vunpack.c.l.b16 %v342
    %v379 = vunpack.c.l.b16 %v343
    %v380 = vpack.c.b16 %v365, %v364
    %v381 = vpack.c.b16 %v367, %v366
    %v382 = vpack.c.b16 %v369, %v368
    %v383 = vpack.c.b16 %v371, %v370
    %v384 = vpack.c.b16 %v373, %v372
    %v385 = vpack.c.b16 %v375, %v374
    %v386 = vpack.c.b16 %v377, %v376
    %v387 = vpack.c.b16 %v379, %v378
    %396 = vmatpush.bf16.msra.mxu0 %v387
    %397 = vmatpush.bf16.msra.mxu0 %v386
    %398 = vmatpush.bf16.msra.mxu0 %v385
    %399 = vmatpush.bf16.msra.mxu0 %v384
    %400 = vmatpush.bf16.msra.mxu0 %v383
    %401 = vmatpush.bf16.msra.mxu0 %v382
    %402 = vmatpush.bf16.msra.mxu0 %v381
    %403 = vmatpush.bf16.msra.mxu0 %v380
    %404 = vmatmul.bf16.gmra.mxu0 %v327
    %v405 = vpop.f32.mrf.mxu0
    %v406 = vadd.f32 %v346, %v405
    %v407 = vpop.f32.mrf.mxu0
    %408 = vdwg.mxu0
    %v409 = vlaneseq
    %v410 = vand.u32 %v409, 127
    %vm411 = vcmp.lt.s32.totalorder %v410, 7
    %v412 = vmax.f32 %v406, 0.0
    %v413 = vsel %vm411, %v412, -1e+30
    %414 = vmax.xlane.f32.xlu0 %v413
    %v415 = vpop.xlane.xlu0 %414
    %v416 = vsub.f32 %v413, %v415
    %v417 = vmul.f32 %v416, 1.442695
    %v418 = vpow.pop %v417
    %419 = vadd.xlane.f32.xlu0 %v418
    %v420 = vpop.xlane.xlu0 %419
    %v421 = vrcp.pop %v420
    %v422 = vmul.f32 %v420, %v421
    %v423 = vsub.f32 1.0, %v422
    %v424 = vmul.f32 %v421, %v423
    %v425 = vadd.f32 %v421, %v424
    %vm426 = vweird.f32 %v420
    %vm427 = vweird.f32 %v421
    %vm428 = vmor %vm426, %vm427
    %v429 = vsel %vm428, %v421, %v425
    %v430 = vand.u32 2147483647, %v420
    %vm431 = vcmp.eq.f32.partialorder %v430, 8.507059e+37
    %v432 = vand.u32 %v420, 2147483648
    %v433 = vor.u32 1.1754944e-38, %v432
    %v434 = vsel %vm431, %v433, %v429
    %v435 = vmul.f32 %v418, %v434
    %vm436 = vcmask 64512
    %437 = vst.msk [vmem:[#allocation11] sm:$0xff] %vm436, %v435
    // Predicated region
    $region58: #{tpu_custom_call.1} parent=1 // pred_check
      _
    $region59: #{tpu_custom_call.1} parent=1 // pred_check_branch
      %439 = sbr.rel (0) target = $region61
    $region60: #{tpu_custom_call.1} parent=1 // pred_region
      %441 = vsyncadd [#allocation4], 0
      %s443 = sshll.u32 [#allocation11], 4
      %s444 = int_to_ptr.vmem [resolvable:$true] %s443
      %s445 = sshll.u32 %s9, 4
      %s446 = int_to_ptr.hbm [resolvable:$true] %s445
      %448 = dma.vmem_to_hbm [thread:$0]  %s444, 128, %s446, [#allocation4]
    $region61: #{tpu_custom_call.1} parent=1 // pred_fallthru
      _
    // Predicated region
    $region62: #{tpu_custom_call.1} parent=1 // pred_check
      _
    $region63: #{tpu_custom_call.1} parent=1 // pred_check_branch
      %450 = sbr.rel (0) target = $region65
    $region64: #{tpu_custom_call.1} parent=1 // pred_region
      %452 = dma.done [#allocation4], 128
    $region65: #{tpu_custom_call.1} parent=1 // pred_fallthru
      _
    %453 = vsyncpa [#allocation3], 1
    %454 = vsyncpa [#allocation6], 1
    %455 = vsyncpa [#allocation9], 1
    %456 = vsyncpa [#allocation4], 1

</llo_original>
